<compile_context>
chip_gen: v6e
topology: v6e:2x2x1
jax: 0.10.0
libtpu: 0.0.40
codegen_flags: <defaults>
</compile_context>

<pallas_src>
import functools

import numpy as np
import jax
import jax.numpy as jnp
from jax.experimental import pallas as pl
from jax.experimental.pallas import tpu as pltpu


# ----------------------------- configuration -------------------------------
INPUT_DIM = 16            # flattened feature dim
OUTPUT_DIM = 4
DEPTH = 5
BATCH = 32

INTERNAL = 2 ** DEPTH - 1   # 31 inner nodes
LEAVES = 2 ** DEPTH         # 32 leaves
LPAD = 128                  # per-layer leaf padding (lane aligned)


def _round_up(n, m):
    return ((n + m - 1) // m) * m


# ------------------- static routing constants (module scope) ----------------
def _build_routing_constants():
    # contrib_l[b, leaf] = p[b, :] @ C[:, l*LPAD + leaf] + rb[l*LPAD + leaf]
    #   child 0 of node i takes p_i      -> C = +1, rb = 0
    #   child 1 of node i takes 1 - p_i  -> C = -1, rb = 1
    c = np.zeros((INTERNAL, DEPTH * LPAD), np.float32)
    rb = np.zeros((1, DEPTH * LPAD), np.float32)
    for layer in range(DEPTH):
        for leaf in range(LEAVES):
            node = (2 ** layer - 1) + (leaf >> (DEPTH - layer))
            bit = (leaf >> (DEPTH - 1 - layer)) & 1
            col = layer * LPAD + leaf
            if bit == 0:
                c[node, col] = 1.0
            else:
                c[node, col] = -1.0
                rb[0, col] = 1.0
    # +/-1/0 selectors are exact in bf16 -> single-pass bf16 MXU matmuls.
    return jnp.asarray(c, jnp.bfloat16), jnp.asarray(rb, jnp.float32)


_C_STACKED, _ROUTE_BIAS = _build_routing_constants()


# ------------------------------ Pallas kernel ------------------------------
def _sdt_kernel(x_ref, w1_ref, b1_ref, c_ref, rb_ref, w2_ref, o_ref):
    # x_ref : (tile_b, F)          bf16  input rows
    # w1_ref: (F, INTERNAL)        bf16  inner-node weights (bias column removed)
    # b1_ref: (1, INTERNAL)        f32   inner-node bias row (W1[:, 0])
    # c_ref : (INTERNAL, D*LPAD)   bf16  stacked +/-1 routing selectors
    # rb_ref: (1, D*LPAD)          f32   routing bias (1 where leaf takes 1-p)
    # w2_ref: (LPAD, O)            bf16  zero-padded leaf weights
    # o_ref : (tile_b, O)          f32   narrow output block
    logits = jnp.dot(x_ref[...], w1_ref[...],
                     preferred_element_type=jnp.float32) + b1_ref[...]
    p = jax.nn.sigmoid(logits).astype(jnp.bfloat16)      # (tile_b, INTERNAL)

    # Fused routing: per-layer lane-aligned 128-wide matmul-gather multiplied
    # straight into mu (no (tile_b, D*LPAD) intermediate kept live).
    mu = None
    for layer in range(DEPTH):
        lo = layer * LPAD
        contrib = (jnp.dot(p, c_ref[:, lo:lo + LPAD],
                           preferred_element_type=jnp.float32)
                   + rb_ref[:, lo:lo + LPAD])
        mu = contrib if layer == 0 else mu * contrib     # (tile_b, LPAD) f32

    # Leaf nodes: padded rows of w2 are zero, mu's padded lanes are zero.
    o_ref[...] = jnp.dot(mu.astype(jnp.bfloat16), w2_ref[...],
                         preferred_element_type=jnp.float32)


# --------------------------- small-batch XLA path ---------------------------
def _sdt_xla(x_flat, w1, w2):
    """Fused pure-XLA forward (used below a batch threshold)."""
    b = x_flat.shape[0]
    xf = x_flat.astype(jnp.float32)
    logits = (xf @ jnp.transpose(w1[:, 1:]).astype(jnp.float32)
              + w1[:, 0].astype(jnp.float32)[None, :])
    p = jax.nn.sigmoid(logits)
    mu = jnp.ones((b, 1), jnp.float32)
    begin = 0
    for layer in range(DEPTH):
        n = 2 ** layer
        pp = p[:, begin:begin + n]
        pair = jnp.stack([pp, 1.0 - pp], axis=2).reshape(b, 2 * n)
        mu = jnp.repeat(mu, 2, axis=1) * pair
        begin += n
    return mu @ jnp.transpose(w2).astype(jnp.float32)


# --------------------------------- wrapper ----------------------------------
@functools.partial(jax.jit, static_argnames=("tile_b", "min_kernel_batch"))
def sdt_forward(x, w1, w2, *, tile_b=2048, min_kernel_batch=1024):
    """x: (B, ...) -> flattened to (B, F); w1: (INTERNAL, F+1); w2: (O, LEAVES)."""
    batch = x.shape[0]
    x_flat = x.reshape(batch, -1)
    feat = x_flat.shape[1]

    # Tiny batches: one grid step would be launch/pipeline-overhead bound;
    # XLA's fused version matches or beats the kernel there.
    if batch < min_kernel_batch:
        return _sdt_xla(x_flat, w1, w2)

    # Batch tiling: multiple of 8 sublanes; cap the tile so the grid has at
    # least 2 steps (keeps both v7x TensorCores busy with "parallel").
    batch_r8 = _round_up(batch, 8)
    tile = _round_up(max(8, min(int(tile_b), batch_r8)), 8)
    if batch_r8 >= 16:
        tile = min(tile, _round_up(batch_r8 // 2, 8))
    padded = _round_up(batch, tile)

    # bf16 MXU operands.
    x_bf = x_flat.astype(jnp.bfloat16)
    if padded != batch:
        x_bf = jnp.pad(x_bf, ((0, padded - batch), (0, 0)))
    w1_bf = jnp.transpose(w1[:, 1:]).astype(jnp.bfloat16)        # (F, INTERNAL)
    b1 = jnp.transpose(w1[:, 0:1]).astype(jnp.float32)           # (1, INTERNAL)
    w2_pad = jnp.zeros((LPAD, OUTPUT_DIM), jnp.bfloat16)
    w2_pad = w2_pad.at[:LEAVES, :].set(jnp.transpose(w2).astype(jnp.bfloat16))

    flops = padded * (2 * feat * INTERNAL
                      + 2 * INTERNAL * DEPTH * LPAD
                      + 2 * LPAD * OUTPUT_DIM)
    bytes_accessed = (padded * feat * 2 + padded * OUTPUT_DIM * 4
                      + feat * INTERNAL * 2 + INTERNAL * 4
                      + INTERNAL * DEPTH * LPAD * 2 + DEPTH * LPAD * 4
                      + LPAD * OUTPUT_DIM * 2)

    out = pl.pallas_call(
        _sdt_kernel,
        out_shape=jax.ShapeDtypeStruct((padded, OUTPUT_DIM), jnp.float32),
        grid=(padded // tile,),
        in_specs=[
            pl.BlockSpec((tile, feat), lambda i: (i, 0)),            # x tile
            pl.BlockSpec((feat, INTERNAL), lambda i: (0, 0)),        # W1 (pinned)
            pl.BlockSpec((1, INTERNAL), lambda i: (0, 0)),           # W1 bias row
            pl.BlockSpec((INTERNAL, DEPTH * LPAD), lambda i: (0, 0)),  # selectors
            pl.BlockSpec((1, DEPTH * LPAD), lambda i: (0, 0)),       # routing bias
            pl.BlockSpec((LPAD, OUTPUT_DIM), lambda i: (0, 0)),      # W2 (pinned)
        ],
        out_specs=pl.BlockSpec((tile, OUTPUT_DIM), lambda i: (i, 0)),
        compiler_params=pltpu.CompilerParams(
            dimension_semantics=("parallel",)),
        cost_estimate=pl.CostEstimate(
            flops=flops,
            transcendentals=padded * INTERNAL,
            bytes_accessed=bytes_accessed),
    )(x_bf, w1_bf, b1, _C_STACKED, _ROUTE_BIAS, w2_pad)

    return out if padded == batch else out[:batch]


# --------------------------- pure-JAX reference -----------------------------
def sdt_reference(x, w1, w2, *, match_kernel_precision=False):
    """Mirrors the PyTorch loop (view/repeat/interleave) exactly in f32, or —
    with match_kernel_precision=True — mirrors the kernel's mixed precision
    (bf16 MXU inputs for all three matmuls, f32 accumulation / products)."""
    batch = x.shape[0]
    xf = x.reshape(batch, -1).astype(jnp.float32)
    w = jnp.transpose(w1[:, 1:]).astype(jnp.float32)
    b = w1[:, 0].astype(jnp.float32)

    if match_kernel_precision:
        logits = jnp.dot(xf.astype(jnp.bfloat16), w.astype(jnp.bfloat16),
                         preferred_element_type=jnp.float32) + b[None, :]
        p = jax.nn.sigmoid(logits).astype(jnp.bfloat16).astype(jnp.float32)
    else:
        logits = xf @ w + b[None, :]
        p = jax.nn.sigmoid(logits)

    path_prob = jnp.stack([p, 1.0 - p], axis=2)                   # (B, INTERNAL, 2)
    mu = jnp.ones((batch, 1, 1), jnp.float32)
    begin, end = 0, 1
    for layer in range(DEPTH):
        pp = path_prob[:, begin:end, :]                           # (B, 2^l, 2)
        mu = jnp.repeat(mu.reshape(batch, -1, 1), 2, axis=2)      # (B, 2^l, 2)
        mu = mu * pp
        begin = end
        end = begin + 2 ** (layer + 1)
    mu = mu.reshape(batch, LEAVES)

    if match_kernel_precision:
        return jnp.dot(mu.astype(jnp.bfloat16),
                       jnp.transpose(w2).astype(jnp.bfloat16),
                       preferred_element_type=jnp.float32)
    return mu @ jnp.transpose(w2).astype(jnp.float32)


# ---------------------------------- main ------------------------------------
if __name__ == "__main__":
    key = jax.random.PRNGKey(0)
    k_x, k_w1, k_w2, k_x2, k_x3 = jax.random.split(key, 5)

    # Same parameter shapes as the nn.Module:
    #   inner_nodes Linear: (INTERNAL, INPUT_DIM + 1), no bias
    #   leaf_nodes  Linear: (OUTPUT_DIM, LEAVES), no bias
    x = jax.random.normal(k_x, (BATCH, INPUT_DIM), jnp.float32)
    w1 = 0.1 * jax.random.normal(k_w1, (INTERNAL, INPUT_DIM + 1), jnp.float32)
    w2 = 0.1 * jax.random.normal(k_w2, (OUTPUT_DIM, LEAVES), jnp.float32)

    # Kernel path forced at small batch (32 rows -> 2 grid steps of 16).
    y = jax.block_until_ready(sdt_forward(x, w1, w2, min_kernel_batch=0))
    assert y.shape == (BATCH, OUTPUT_DIM)
    np.testing.assert_allclose(
        np.asarray(y),
        np.asarray(sdt_reference(x, w1, w2, match_kernel_precision=True)),
        atol=3e-3, rtol=0)
    np.testing.assert_allclose(
        np.asarray(y), np.asarray(sdt_reference(x, w1, w2)),
        atol=2e-2, rtol=2e-2)

    # Batch-padding / multi-tile path (20 rows -> padded 24, 3 tiles of 8).
    x2 = jax.random.normal(k_x2, (20, INPUT_DIM), jnp.float32)
    y2 = jax.block_until_ready(
        sdt_forward(x2, w1, w2, tile_b=8, min_kernel_batch=0))
    assert y2.shape == (20, OUTPUT_DIM)
    np.testing.assert_allclose(
        np.asarray(y2),
        np.asarray(sdt_reference(x2, w1, w2, match_kernel_precision=True)),
        atol=3e-3, rtol=0)

    # Streaming-batch path with default dispatch (kernel, grid=(2,), tile 2048).
    x3 = jax.random.normal(k_x3, (4096, INPUT_DIM), jnp.float32)
    y3 = jax.block_until_ready(sdt_forward(x3, w1, w2))
    assert y3.shape == (4096, OUTPUT_DIM)
    np.testing.assert_allclose(
        np.asarray(y3),
        np.asarray(sdt_reference(x3, w1, w2, match_kernel_precision=True)),
        atol=3e-3, rtol=0)

    # Tiny-batch default dispatch falls back to the fused XLA path.
    y_small = jax.block_until_ready(sdt_forward(x, w1, w2))
    np.testing.assert_allclose(
        np.asarray(y_small), np.asarray(sdt_reference(x, w1, w2)),
        atol=1e-5, rtol=1e-5)

    print("KERNEL_OK")
</pallas_src>

<mosaic_0001>
module attributes {stable_mosaic.version = 11 : i64} {
  func.func @_sdt_kernel(%arg0: i32, %arg1: memref<16x16xbf16, #tpu.memory_space<vmem>>, %arg2: memref<16x31xbf16, #tpu.memory_space<vmem>>, %arg3: memref<1x31xf32, #tpu.memory_space<vmem>>, %arg4: memref<31x640xbf16, #tpu.memory_space<vmem>>, %arg5: memref<1x640xf32, #tpu.memory_space<vmem>>, %arg6: memref<128x4xbf16, #tpu.memory_space<vmem>>, %arg7: memref<16x4xf32, #tpu.memory_space<vmem>>) attributes {dimension_semantics = [#tpu.dimension_semantics<parallel>], iteration_bounds = array<i64: 2>, scalar_prefetch = 0 : i64, scratch_operands = 0 : i64, tpu.core_type = #tpu.core_type<tc>, window_params = [{transform_indices = @transform_0, window_bounds = array<i64: 16, 16>}, {pipeline_mode = #tpu.pipeline_mode<synchronous>, transform_indices = @transform_1, window_bounds = array<i64: 16, 31>}, {pipeline_mode = #tpu.pipeline_mode<synchronous>, transform_indices = @transform_2, window_bounds = array<i64: 1, 31>}, {pipeline_mode = #tpu.pipeline_mode<synchronous>, transform_indices = @transform_3, window_bounds = array<i64: 31, 640>}, {pipeline_mode = #tpu.pipeline_mode<synchronous>, transform_indices = @transform_4, window_bounds = array<i64: 1, 640>}, {pipeline_mode = #tpu.pipeline_mode<synchronous>, transform_indices = @transform_5, window_bounds = array<i64: 128, 4>}, {transform_indices = @transform_6, window_bounds = array<i64: 16, 4>}]} {
    %c0 = arith.constant 0 : index
    %c0_0 = arith.constant 0 : index
    %0 = vector.load %arg1[%c0, %c0_0] : memref<16x16xbf16, #tpu.memory_space<vmem>>, vector<16x16xbf16>
    %c0_1 = arith.constant 0 : index
    %c0_2 = arith.constant 0 : index
    %1 = vector.load %arg2[%c0_1, %c0_2] : memref<16x31xbf16, #tpu.memory_space<vmem>>, vector<16x31xbf16>
    %cst = arith.constant dense<0.000000e+00> : vector<16x31xf32>
    %2 = tpu.matmul %0, %1, %cst {dimension_numbers = #tpu.dot_dimension_numbers<[1], [0], [0], [1], [0, 0, 1, 1], [], []>} : vector<16x16xbf16>, vector<16x31xbf16>, vector<16x31xf32> -> vector<16x31xf32>
    %c0_3 = arith.constant 0 : index
    %c0_4 = arith.constant 0 : index
    %3 = vector.load %arg3[%c0_3, %c0_4] : memref<1x31xf32, #tpu.memory_space<vmem>>, vector<1x31xf32>
    %4 = vector.broadcast %3 : vector<1x31xf32> to vector<16x31xf32>
    %5 = arith.addf %2, %4 : vector<16x31xf32>
    %6 = arith.negf %5 : vector<16x31xf32>
    %7 = math.exp %6 : vector<16x31xf32>
    %cst_5 = arith.constant 1.000000e+00 : f32
    %8 = vector.broadcast %cst_5 : f32 to vector<16x31xf32>
    %9 = arith.addf %8, %7 : vector<16x31xf32>
    %10 = arith.divf %8, %9 : vector<16x31xf32>
    %11 = arith.truncf %10 : vector<16x31xf32> to vector<16x31xbf16>
    %c0_6 = arith.constant 0 : index
    %c0_7 = arith.constant 0 : index
    %12 = vector.load %arg4[%c0_6, %c0_7] : memref<31x640xbf16, #tpu.memory_space<vmem>>, vector<31x128xbf16>
    %cst_8 = arith.constant dense<0.000000e+00> : vector<16x128xf32>
    %13 = tpu.matmul %11, %12, %cst_8 {dimension_numbers = #tpu.dot_dimension_numbers<[1], [0], [0], [1], [0, 0, 1, 1], [], []>} : vector<16x31xbf16>, vector<31x128xbf16>, vector<16x128xf32> -> vector<16x128xf32>
    %c0_9 = arith.constant 0 : index
    %c0_10 = arith.constant 0 : index
    %14 = vector.load %arg5[%c0_9, %c0_10] : memref<1x640xf32, #tpu.memory_space<vmem>>, vector<1x128xf32>
    %15 = vector.broadcast %14 : vector<1x128xf32> to vector<16x128xf32>
    %16 = arith.addf %13, %15 : vector<16x128xf32>
    %c0_11 = arith.constant 0 : index
    %c128 = arith.constant 128 : index
    %17 = vector.load %arg4[%c0_11, %c128] : memref<31x640xbf16, #tpu.memory_space<vmem>>, vector<31x128xbf16>
    %cst_12 = arith.constant dense<0.000000e+00> : vector<16x128xf32>
    %18 = tpu.matmul %11, %17, %cst_12 {dimension_numbers = #tpu.dot_dimension_numbers<[1], [0], [0], [1], [0, 0, 1, 1], [], []>} : vector<16x31xbf16>, vector<31x128xbf16>, vector<16x128xf32> -> vector<16x128xf32>
    %c0_13 = arith.constant 0 : index
    %c128_14 = arith.constant 128 : index
    %19 = vector.load %arg5[%c0_13, %c128_14] : memref<1x640xf32, #tpu.memory_space<vmem>>, vector<1x128xf32>
    %20 = vector.broadcast %19 : vector<1x128xf32> to vector<16x128xf32>
    %21 = arith.addf %18, %20 : vector<16x128xf32>
    %22 = arith.mulf %16, %21 : vector<16x128xf32>
    %c0_15 = arith.constant 0 : index
    %c256 = arith.constant 256 : index
    %23 = vector.load %arg4[%c0_15, %c256] : memref<31x640xbf16, #tpu.memory_space<vmem>>, vector<31x128xbf16>
    %cst_16 = arith.constant dense<0.000000e+00> : vector<16x128xf32>
    %24 = tpu.matmul %11, %23, %cst_16 {dimension_numbers = #tpu.dot_dimension_numbers<[1], [0], [0], [1], [0, 0, 1, 1], [], []>} : vector<16x31xbf16>, vector<31x128xbf16>, vector<16x128xf32> -> vector<16x128xf32>
    %c0_17 = arith.constant 0 : index
    %c256_18 = arith.constant 256 : index
    %25 = vector.load %arg5[%c0_17, %c256_18] : memref<1x640xf32, #tpu.memory_space<vmem>>, vector<1x128xf32>
    %26 = vector.broadcast %25 : vector<1x128xf32> to vector<16x128xf32>
    %27 = arith.addf %24, %26 : vector<16x128xf32>
    %28 = arith.mulf %22, %27 : vector<16x128xf32>
    %c0_19 = arith.constant 0 : index
    %c384 = arith.constant 384 : index
    %29 = vector.load %arg4[%c0_19, %c384] : memref<31x640xbf16, #tpu.memory_space<vmem>>, vector<31x128xbf16>
    %cst_20 = arith.constant dense<0.000000e+00> : vector<16x128xf32>
    %30 = tpu.matmul %11, %29, %cst_20 {dimension_numbers = #tpu.dot_dimension_numbers<[1], [0], [0], [1], [0, 0, 1, 1], [], []>} : vector<16x31xbf16>, vector<31x128xbf16>, vector<16x128xf32> -> vector<16x128xf32>
    %c0_21 = arith.constant 0 : index
    %c384_22 = arith.constant 384 : index
    %31 = vector.load %arg5[%c0_21, %c384_22] : memref<1x640xf32, #tpu.memory_space<vmem>>, vector<1x128xf32>
    %32 = vector.broadcast %31 : vector<1x128xf32> to vector<16x128xf32>
    %33 = arith.addf %30, %32 : vector<16x128xf32>
    %34 = arith.mulf %28, %33 : vector<16x128xf32>
    %c0_23 = arith.constant 0 : index
    %c512 = arith.constant 512 : index
    %35 = vector.load %arg4[%c0_23, %c512] : memref<31x640xbf16, #tpu.memory_space<vmem>>, vector<31x128xbf16>
    %cst_24 = arith.constant dense<0.000000e+00> : vector<16x128xf32>
    %36 = tpu.matmul %11, %35, %cst_24 {dimension_numbers = #tpu.dot_dimension_numbers<[1], [0], [0], [1], [0, 0, 1, 1], [], []>} : vector<16x31xbf16>, vector<31x128xbf16>, vector<16x128xf32> -> vector<16x128xf32>
    %c0_25 = arith.constant 0 : index
    %c512_26 = arith.constant 512 : index
    %37 = vector.load %arg5[%c0_25, %c512_26] : memref<1x640xf32, #tpu.memory_space<vmem>>, vector<1x128xf32>
    %38 = vector.broadcast %37 : vector<1x128xf32> to vector<16x128xf32>
    %39 = arith.addf %36, %38 : vector<16x128xf32>
    %40 = arith.mulf %34, %39 : vector<16x128xf32>
    %41 = arith.truncf %40 : vector<16x128xf32> to vector<16x128xbf16>
    %c0_27 = arith.constant 0 : index
    %c0_28 = arith.constant 0 : index
    %42 = vector.load %arg6[%c0_27, %c0_28] : memref<128x4xbf16, #tpu.memory_space<vmem>>, vector<128x4xbf16>
    %cst_29 = arith.constant dense<0.000000e+00> : vector<16x4xf32>
    %43 = tpu.matmul %41, %42, %cst_29 {dimension_numbers = #tpu.dot_dimension_numbers<[1], [0], [0], [1], [0, 0, 1, 1], [], []>} : vector<16x128xbf16>, vector<128x4xbf16>, vector<16x4xf32> -> vector<16x4xf32>
    %c0_30 = arith.constant 0 : index
    %c0_31 = arith.constant 0 : index
    %44 = vector.load %arg7[%c0_30, %c0_31] : memref<16x4xf32, #tpu.memory_space<vmem>>, vector<16x4xf32>
    tpu.vector_store %arg7[%c0_30, %c0_31], %43 {strides = array<i32>} : memref<16x4xf32, #tpu.memory_space<vmem>>, vector<16x4xf32>,
    return
  }
  func.func @transform_0(%arg0: i32) -> (i32, i32) {
    %c0_i32 = arith.constant 0 : i32
    %c0_i32_0 = arith.constant 0 : i32
    return %arg0, %c0_i32 : i32, i32
  }
  func.func @transform_1(%arg0: i32) -> (i32, i32) {
    %c0_i32 = arith.constant 0 : i32
    %c0_i32_0 = arith.constant 0 : i32
    %c0_i32_1 = arith.constant 0 : i32
    return %c0_i32, %c0_i32_0 : i32, i32
  }
  func.func @transform_2(%arg0: i32) -> (i32, i32) {
    %c0_i32 = arith.constant 0 : i32
    %c0_i32_0 = arith.constant 0 : i32
    %c0_i32_1 = arith.constant 0 : i32
    return %c0_i32, %c0_i32_0 : i32, i32
  }
  func.func @transform_3(%arg0: i32) -> (i32, i32) {
    %c0_i32 = arith.constant 0 : i32
    %c0_i32_0 = arith.constant 0 : i32
    %c0_i32_1 = arith.constant 0 : i32
    return %c0_i32, %c0_i32_0 : i32, i32
  }
  func.func @transform_4(%arg0: i32) -> (i32, i32) {
    %c0_i32 = arith.constant 0 : i32
    %c0_i32_0 = arith.constant 0 : i32
    %c0_i32_1 = arith.constant 0 : i32
    return %c0_i32, %c0_i32_0 : i32, i32
  }
  func.func @transform_5(%arg0: i32) -> (i32, i32) {
    %c0_i32 = arith.constant 0 : i32
    %c0_i32_0 = arith.constant 0 : i32
    %c0_i32_1 = arith.constant 0 : i32
    return %c0_i32, %c0_i32_0 : i32, i32
  }
  func.func @transform_6(%arg0: i32) -> (i32, i32) {
    %c0_i32 = arith.constant 0 : i32
    %c0_i32_0 = arith.constant 0 : i32
    return %arg0, %c0_i32 : i32, i32
  }
}

</mosaic_0001>

<llo_original>
// kernel: sdt_forward.1
$region0: #{sdt_forward.1}
  #allocation0 [shape = 'u32[]', space=smem, size = 0x4, offset = 0x4, fixed_abs, tag = 'smem constant byte address 0x4 - core index']
  #allocation1 [shape = 'u32[144,128]{1,0:T(1,128)}', space=vmem, size = 0x12000, scoped, tag = 'internal scratch']
  %s0 = inlined_call_operand.vmem [shape: bf16[32,16], index: 0, kind: input, shape index: {}]
  %s1 = inlined_call_operand.vmem [shape: bf16[16,31], index: 1, kind: input, shape index: {}]
  %s2 = inlined_call_operand.vmem [shape: f32[1,31], index: 2, kind: input, shape index: {}]
  %s3 = inlined_call_operand.vmem [shape: bf16[31,640], index: 3, kind: input, shape index: {}]
  %s4 = inlined_call_operand.vmem [shape: f32[1,640], index: 4, kind: input, shape index: {}]
  %s5 = inlined_call_operand.vmem [shape: bf16[128,4], index: 5, kind: input, shape index: {}]
  %s6 = inlined_call_operand.vmem [shape: f32[32,4], index: 6, kind: output, shape index: {}]
  %s7 = sld [smem:[#allocation0]]
  $region57: #{sdt_forward.1} parent=0
    _
  %s9 = ssub.s32 1, %s7
  %s10 = scalar_select 0, %s9, %s7
  loop: start=0, step=1, limit=4
  $region2: #{sdt_forward.1} parent=0 // loop_pre_header
    _
  $region3: #{sdt_forward.1} parent=0 // loop_header
    %s12 = sphi 0, %s16
    %p13 = scmp.ge.s32.totalorder %s12, 4
    %s22 = sphi 0, %s24
    %s25 = sphi 0, %s22
    %s26 = sphi 0, %s25
    %s42 = sphi 0, %s26
    %s46 = sphi 0, %s46
    %s48 = sphi 0, %s46
    %s49 = sphi 0, %s48
    %s63 = sphi 0, %s49
    %s67 = sphi 0, %s67
    %s69 = sphi 0, %s67
    %s70 = sphi 0, %s69
    %s84 = sphi 0, %s70
    %s88 = sphi 0, %s88
    %s90 = sphi 0, %s88
    %s91 = sphi 0, %s90
    %s105 = sphi 0, %s91
    %s109 = sphi 0, %s109
    %s111 = sphi 0, %s109
    %s112 = sphi 0, %s111
    %s126 = sphi 0, %s112
    %s130 = sphi 0, %s130
    %s132 = sphi 0, %s130
    %s133 = sphi 0, %s132
    %s147 = sphi 0, %s133
    %s153 = sphi 0, %s155
    %s156 = sphi 0, %s153
    %s157 = sphi 0, %s156
    %s173 = sphi 0, %s157
  $region4: #{sdt_forward.1} parent=0 // loop_header_branch
    %15 = sbr.rel (%p13) target = $region8
  $region5: #{sdt_forward.1} parent=0 // loop_body
    %s17 = ssub.s32 %s12, 1
    %s18 = ssub.s32 %s12, 2
    %s19 = sadd.s32 %s12, 1
    %s20 = ssub.s32 %s12, %s19
    %p21 = scmp.eq.s32.totalorder %s20, 0
    %s23 = sadd.s32 %s22, 1
    %s24 = scalar_select %p21, %s22, %s23
    %p27 = pneg %p21
    %p28 = scmp.eq.s32.totalorder %s12, 1
    %p29 = por %p27, %p28
    %p30 = scmp.ne.s32.totalorder %s22, %s25
    %p31 = scmp.eq.s32.totalorder %s12, 0
    %p32 = por %p30, %p31
    %p33 = scmp.ne.s32.totalorder %s22, %s25
    %p34 = scmp.eq.s32.totalorder %s17, 1
    %p35 = por %p33, %p34
    %p36 = scmp.ne.s32.totalorder %s25, %s26
    %p37 = scmp.eq.s32.totalorder %s17, 0
    %p38 = por %p36, %p37
    %p39 = scmp.ne.s32.totalorder %s25, %s26
    %p40 = scmp.eq.s32.totalorder %s18, 1
    %p41 = por %p39, %p40
    %p43 = scmp.ne.s32.totalorder %s26, %s42
    %p44 = scmp.eq.s32.totalorder %s18, 0
    %p45 = por %p43, %p44
    %s47 = sadd.s32 %s46, 1
    %p50 = scmp.eq.s32.totalorder %s12, 1
    %p51 = scmp.ne.s32.totalorder %s46, %s48
    %p52 = scmp.eq.s32.totalorder %s12, 0
    %p53 = por %p51, %p52
    %p54 = scmp.ne.s32.totalorder %s46, %s48
    %p55 = scmp.eq.s32.totalorder %s17, 1
    %p56 = por %p54, %p55
    %p57 = scmp.ne.s32.totalorder %s48, %s49
    %p58 = scmp.eq.s32.totalorder %s17, 0
    %p59 = por %p57, %p58
    %p60 = scmp.ne.s32.totalorder %s48, %s49
    %p61 = scmp.eq.s32.totalorder %s18, 1
    %p62 = por %p60, %p61
    %p64 = scmp.ne.s32.totalorder %s49, %s63
    %p65 = scmp.eq.s32.totalorder %s18, 0
    %p66 = por %p64, %p65
    %s68 = sadd.s32 %s67, 1
    %p71 = scmp.eq.s32.totalorder %s12, 1
    %p72 = scmp.ne.s32.totalorder %s67, %s69
    %p73 = scmp.eq.s32.totalorder %s12, 0
    %p74 = por %p72, %p73
    %p75 = scmp.ne.s32.totalorder %s67, %s69
    %p76 = scmp.eq.s32.totalorder %s17, 1
    %p77 = por %p75, %p76
    %p78 = scmp.ne.s32.totalorder %s69, %s70
    %p79 = scmp.eq.s32.totalorder %s17, 0
    %p80 = por %p78, %p79
    %p81 = scmp.ne.s32.totalorder %s69, %s70
    %p82 = scmp.eq.s32.totalorder %s18, 1
    %p83 = por %p81, %p82
    %p85 = scmp.ne.s32.totalorder %s70, %s84
    %p86 = scmp.eq.s32.totalorder %s18, 0
    %p87 = por %p85, %p86
    %s89 = sadd.s32 %s88, 1
    %p92 = scmp.eq.s32.totalorder %s12, 1
    %p93 = scmp.ne.s32.totalorder %s88, %s90
    %p94 = scmp.eq.s32.totalorder %s12, 0
    %p95 = por %p93, %p94
    %p96 = scmp.ne.s32.totalorder %s88, %s90
    %p97 = scmp.eq.s32.totalorder %s17, 1
    %p98 = por %p96, %p97
    %p99 = scmp.ne.s32.totalorder %s90, %s91
    %p100 = scmp.eq.s32.totalorder %s17, 0
    %p101 = por %p99, %p100
    %p102 = scmp.ne.s32.totalorder %s90, %s91
    %p103 = scmp.eq.s32.totalorder %s18, 1
    %p104 = por %p102, %p103
    %p106 = scmp.ne.s32.totalorder %s91, %s105
    %p107 = scmp.eq.s32.totalorder %s18, 0
    %p108 = por %p106, %p107
    %s110 = sadd.s32 %s109, 1
    %p113 = scmp.eq.s32.totalorder %s12, 1
    %p114 = scmp.ne.s32.totalorder %s109, %s111
    %p115 = scmp.eq.s32.totalorder %s12, 0
    %p116 = por %p114, %p115
    %p117 = scmp.ne.s32.totalorder %s109, %s111
    %p118 = scmp.eq.s32.totalorder %s17, 1
    %p119 = por %p117, %p118
    %p120 = scmp.ne.s32.totalorder %s111, %s112
    %p121 = scmp.eq.s32.totalorder %s17, 0
    %p122 = por %p120, %p121
    %p123 = scmp.ne.s32.totalorder %s111, %s112
    %p124 = scmp.eq.s32.totalorder %s18, 1
    %p125 = por %p123, %p124
    %p127 = scmp.ne.s32.totalorder %s112, %s126
    %p128 = scmp.eq.s32.totalorder %s18, 0
    %p129 = por %p127, %p128
    %s131 = sadd.s32 %s130, 1
    %p134 = scmp.eq.s32.totalorder %s12, 1
    %p135 = scmp.ne.s32.totalorder %s130, %s132
    %p136 = scmp.eq.s32.totalorder %s12, 0
    %p137 = por %p135, %p136
    %p138 = scmp.ne.s32.totalorder %s130, %s132
    %p139 = scmp.eq.s32.totalorder %s17, 1
    %p140 = por %p138, %p139
    %p141 = scmp.ne.s32.totalorder %s132, %s133
    %p142 = scmp.eq.s32.totalorder %s17, 0
    %p143 = por %p141, %p142
    %p144 = scmp.ne.s32.totalorder %s132, %s133
    %p145 = scmp.eq.s32.totalorder %s18, 1
    %p146 = por %p144, %p145
    %p148 = scmp.ne.s32.totalorder %s133, %s147
    %p149 = scmp.eq.s32.totalorder %s18, 0
    %p150 = por %p148, %p149
    %s151 = ssub.s32 %s12, %s19
    %p152 = scmp.eq.s32.totalorder %s151, 0
    %s154 = sadd.s32 %s153, 1
    %s155 = scalar_select %p152, %s153, %s154
    %p158 = pneg %p152
    %p159 = scmp.eq.s32.totalorder %s12, 1
    %p160 = por %p158, %p159
    %p161 = scmp.ne.s32.totalorder %s153, %s156
    %p162 = scmp.eq.s32.totalorder %s12, 0
    %p163 = por %p161, %p162
    %p164 = scmp.ne.s32.totalorder %s153, %s156
    %p165 = scmp.eq.s32.totalorder %s17, 1
    %p166 = por %p164, %p165
    %p167 = scmp.ne.s32.totalorder %s156, %s157
    %p168 = scmp.eq.s32.totalorder %s17, 0
    %p169 = por %p167, %p168
    %p170 = scmp.ne.s32.totalorder %s156, %s157
    %p171 = scmp.eq.s32.totalorder %s18, 1
    %p172 = por %p170, %p171
    %p174 = scmp.ne.s32.totalorder %s157, %s173
    %p175 = scmp.eq.s32.totalorder %s18, 0
    %p176 = por %p174, %p175
    %p177 = scmp.le.s32.totalorder 1, %s12
    %p178 = scmp.lt.s32.totalorder %s12, 3
    %p179 = pnand %p177, %p178
    %p180 = pneg %p179
    // Predicated region
    $region9: #{sdt_forward.1} parent=5 // pred_check
      _
    $region10: #{sdt_forward.1} parent=5 // pred_check_branch
      %182 = sbr.rel (%p179) target = $region12
    $region11: #{sdt_forward.1} parent=5 // pred_region
      %s183 = ssub.s32 %s12, 1
      // Predicated region
      $region13: #{sdt_forward.1} parent=11 // pred_check
        %p184 = pneg %p59
      $region14: #{sdt_forward.1} parent=11 // pred_check_branch
        %186 = sbr.rel (%p184) target = $region16
      $region15: #{sdt_forward.1} parent=11 // pred_region
        _
      $region16: #{sdt_forward.1} parent=11 // pred_fallthru
        _
      // Predicated region
      $region17: #{sdt_forward.1} parent=11 // pred_check
        %p187 = pneg %p80
      $region18: #{sdt_forward.1} parent=11 // pred_check_branch
        %189 = sbr.rel (%p187) target = $region20
      $region19: #{sdt_forward.1} parent=11 // pred_region
        _
      $region20: #{sdt_forward.1} parent=11 // pred_fallthru
        _
      // Predicated region
      $region21: #{sdt_forward.1} parent=11 // pred_check
        %p190 = pneg %p101
      $region22: #{sdt_forward.1} parent=11 // pred_check_branch
        %192 = sbr.rel (%p190) target = $region24
      $region23: #{sdt_forward.1} parent=11 // pred_region
        _
      $region24: #{sdt_forward.1} parent=11 // pred_fallthru
        _
      // Predicated region
      $region25: #{sdt_forward.1} parent=11 // pred_check
        %p193 = pneg %p122
      $region26: #{sdt_forward.1} parent=11 // pred_check_branch
        %195 = sbr.rel (%p193) target = $region28
      $region27: #{sdt_forward.1} parent=11 // pred_region
        _
      $region28: #{sdt_forward.1} parent=11 // pred_fallthru
        _
      // Predicated region
      $region29: #{sdt_forward.1} parent=11 // pred_check
        %p196 = pneg %p143
      $region30: #{sdt_forward.1} parent=11 // pred_check_branch
        %198 = sbr.rel (%p196) target = $region32
      $region31: #{sdt_forward.1} parent=11 // pred_region
        _
      $region32: #{sdt_forward.1} parent=11 // pred_fallthru
        _
    $region12: #{sdt_forward.1} parent=5 // pred_fallthru
      _
    %p199 = scmp.lt.s32.totalorder %s12, 2
    // Predicated region
    $region33: #{sdt_forward.1} parent=5 // pred_check
      %p200 = pneg %p199
    $region34: #{sdt_forward.1} parent=5 // pred_check_branch
      %202 = sbr.rel (%p200) target = $region36
    $region35: #{sdt_forward.1} parent=5 // pred_region
      // Predicated region
      $region37: #{sdt_forward.1} parent=35 // pred_check
        %p203 = pneg %p32
      $region38: #{sdt_forward.1} parent=35 // pred_check_branch
        %205 = sbr.rel (%p203) target = $region40
      $region39: #{sdt_forward.1} parent=35 // pred_region
        %s206 = smul.u32 2, %s12
        %p207 = scmp.lt.s32.totalorder %s206, 3
        %s208 = scalar_select %p207, %s206, 3
        %s209 = smul.addr %s208, 4
        %s210 = scalar_lea.vmem %s0, %s209
        %s211 = smul.u32 2, %s12
      $region40: #{sdt_forward.1} parent=35 // pred_fallthru
        _
    $region36: #{sdt_forward.1} parent=5 // pred_fallthru
      _
    %p212 = scmp.le.s32.totalorder 1, %s12
    %p213 = scmp.lt.s32.totalorder %s12, 3
    %p214 = pnand %p212, %p213
    %p215 = pneg %p214
    // Predicated region
    $region41: #{sdt_forward.1} parent=5 // pred_check
      _
    $region42: #{sdt_forward.1} parent=5 // pred_check_branch
      %217 = sbr.rel (%p214) target = $region44
    $region43: #{sdt_forward.1} parent=5 // pred_region
      %s218 = ssub.s32 %s12, 1
      %s219 = smul.u32 2, %s17
      %p220 = scmp.lt.s32.totalorder %s219, 3
      %s221 = scalar_select %p220, %s219, 3
      %s222 = smul.addr %s221, 4
      %s223 = scalar_lea.vmem %s0, %s222
      %p224 = pneg %p38
      %p225 = pneg %p35
      %p226 = pneg %p59
      %p227 = pneg %p56
      %p228 = pneg %p80
      %p229 = pneg %p77
      %p230 = pneg %p101
      %p231 = pneg %p98
      %p232 = pneg %p122
      %p233 = pneg %p119
      %p234 = pneg %p143
      %p235 = pneg %p140
      %p236 = pneg %p169
      %p237 = pneg %p166
      %s238 = smul.u32 2, %s17
      %p239 = scmp.lt.s32.totalorder %s238, 3
      %s240 = scalar_select %p239, %s238, 3
      %s241 = smul.addr %s240, 8
      %s242 = scalar_lea.vmem %s6, %s241
      %s243 = smul.u32 2, %s17
      %p244 = scmp.lt.s32.totalorder %s243, 3
      %s245 = scalar_select %p244, %s243, 3
      %s246 = smul.addr %s245, 4
      %s247 = scalar_lea.vmem %s0, %s246
      %s248 = smul.u32 2, %s17
      %s249 = smul.u32 2, %s17
      %p250 = scmp.lt.s32.totalorder %s249, 3
      %s251 = scalar_select %p250, %s249, 3
      %s252 = smul.addr %s251, 8
      %s253 = scalar_lea.vmem %s6, %s252
      %s254 = smul.u32 2, %s17
      %v256 = vld [vmem:[%s247] sm:$0xf]
      %v257 = vld [vmem:[%s247 + $0x4] sm:$0xf]
      %v258 = vld [vmem:[%s1] sm:$0xf]
      %v259 = vld [vmem:[%s1 + $0x4] sm:$0xf]
      %v260 = vld [vmem:[%s2] sm:$0x1]
      %v262 = vlaneseq
      %v263 = vshrl.u32 %v262, 7
      %v264 = vsub.s32 0, %v263
      %v265 = vrot.slane %v260, %v264
      %v269 = vunpack.c.l.b16 %v256
      %v270 = vunpack.c.l.b16 %v257
      %v271 = vpack.c.b16 %v270, %v269
      %v274 = vunpack.c.l.b16 %v258
      %v275 = vunpack.c.l.b16 %v259
      %v276 = vpack.c.b16 %v275, %v274
      %vm278 = vcmask 130048
      %v280 = vsel %vm278, %v271, 0
      %282 = vmatprep.subr.bf16.mxu0 0
      %283 = vmatpush1.bf16.msra.mxu0 0
      %284 = vmatprep.subr.bf16.mxu0 0
      %285 = vmatpush1.bf16.msra.mxu0 0
      %286 = vmatprep.subr.bf16.mxu0 0
      %287 = vmatpush1.bf16.msra.mxu0 0
      %288 = vmatprep.subr.bf16.mxu0 0
      %289 = vmatpush1.bf16.msra.mxu0 0
      %290 = vmatprep.subr.bf16.mxu0 0
      %291 = vmatpush1.bf16.msra.mxu0 0
      %292 = vmatprep.subr.bf16.mxu0 0
      %293 = vmatpush1.bf16.msra.mxu0 0
      %294 = vmatprep.subr.bf16.mxu0 0
      %295 = vmatpush1.bf16.msra.mxu0 0
      %296 = vmatprep.subr.bf16.mxu0 0
      %297 = vmatpush1.bf16.msra.mxu0 %v276
      %298 = vmatprep.subr.bf16.mxu0 0
      %299 = vmatpush2.bf16.msra.mxu0 0
      %300 = vmatprep.subr.bf16.mxu0 0
      %301 = vmatpush2.bf16.msra.mxu0 0
      %302 = vmatprep.subr.bf16.mxu0 0
      %303 = vmatpush2.bf16.msra.mxu0 0
      %304 = vmatprep.subr.bf16.mxu0 0
      %305 = vmatpush2.bf16.msra.mxu0 0
      %306 = vmatprep.subr.bf16.mxu0 0
      %307 = vmatpush2.bf16.msra.mxu0 0
      %308 = vmatprep.subr.bf16.mxu0 0
      %309 = vmatpush2.bf16.msra.mxu0 0
      %310 = vmatprep.subr.bf16.mxu0 0
      %311 = vmatpush2.bf16.msra.mxu0 0
      %312 = vmatprep.subr.bf16.mxu0 0
      %313 = vmatpush2.bf16.msra.mxu0 0
      %314 = vmatprep.mubr.bf16.mxu0 0
      %315 = vmatmul.mubr.bf16.gmra.mxu0 %v280
      %v316 = vpop.f32.mrf.mxu0
      %v317 = vadd.f32 %v265, %v316
      %v318 = vpop.f32.mrf.mxu0
      %v319 = vpop.f32.mrf.mxu0
      %v320 = vadd.f32 %v265, %v319
      %v321 = vpop.f32.mrf.mxu0
      %322 = vdwg.mxu0
      %v323 = vxor.u32 %v317, 2147483648
      %v324 = vxor.u32 %v320, 2147483648
      %v325 = vmul.f32 %v323, 1.442695
      %v326 = vpow.pop %v325
      %v327 = vmul.f32 %v324, 1.442695
      %v328 = vpow.pop %v327
      %v329 = vadd.f32 %v326, 1.0
      %v330 = vadd.f32 %v328, 1.0
      %v331 = vrcp.pop %v329
      %v332 = vmul.f32 1.0, %v331
      %v333 = vrcp.pop %v330
      %v334 = vmul.f32 1.0, %v333
      %v335 = vpack.c.bf16 %v334, %v332
      %v336 = vld [vmem:[%s3] sm:$0xf]
      %v337 = vld [vmem:[%s3 + $0x14] sm:$0xf]
      %v338 = vld [vmem:[%s3 + $0x28] sm:$0xf]
      %v339 = vld [vmem:[%s3 + $0x3c] sm:$0xf]
      %v340 = vld [vmem:[%s4] sm:$0x1]
      %v342 = vlaneseq
      %v343 = vshrl.u32 %v342, 7
      %v344 = vsub.s32 0, %v343
      %v345 = vrot.slane %v340, %v344
      %v351 = vunpack.c.l.b16 %v336
      %v352 = vunpack.c.l.b16 %v337
      %v353 = vunpack.c.l.b16 %v338
      %v354 = vunpack.c.l.b16 %v339
      %v355 = vpack.c.b16 %v352, %v351
      %v356 = vpack.c.b16 %v354, %v353
      %vm358 = vcmask 252928
      %v360 = vsel %vm358, %v335, 0
      %vm362 = vcmask 1046528
      %vm363 = vcmask 1047552
      %v364 = vsel %vm362, 4294967295, 65535
      %v365 = vsel %vm363, %v364, 0
      %v367 = vand.u32 %v356, %v365
      %369 = vmatprep.subr.bf16.mxu0 0
      %370 = vmatpush1.bf16.msra.mxu0 0
      %371 = vmatprep.subr.bf16.mxu0 0
      %372 = vmatpush1.bf16.msra.mxu0 0
      %373 = vmatprep.subr.bf16.mxu0 0
      %374 = vmatpush1.bf16.msra.mxu0 0
      %375 = vmatprep.subr.bf16.mxu0 0
      %376 = vmatpush1.bf16.msra.mxu0 0
      %377 = vmatprep.subr.bf16.mxu0 0
      %378 = vmatpush1.bf16.msra.mxu0 0
      %379 = vmatprep.subr.bf16.mxu0 0
      %380 = vmatpush1.bf16.msra.mxu0 0
      %381 = vmatprep.subr.bf16.mxu0 0
      %382 = vmatpush1.bf16.msra.mxu0 %v367
      %383 = vmatprep.subr.bf16.mxu0 0
      %384 = vmatpush1.bf16.msra.mxu0 %v355
      %385 = vmatprep.subr.bf16.mxu0 0
      %386 = vmatpush2.bf16.msra.mxu0 0
      %387 = vmatprep.subr.bf16.mxu0 0
      %388 = vmatpush2.bf16.msra.mxu0 0
      %389 = vmatprep.subr.bf16.mxu0 0
      %390 = vmatpush2.bf16.msra.mxu0 0
      %391 = vmatprep.subr.bf16.mxu0 0
      %392 = vmatpush2.bf16.msra.mxu0 0
      %393 = vmatprep.subr.bf16.mxu0 0
      %394 = vmatpush2.bf16.msra.mxu0 0
      %395 = vmatprep.subr.bf16.mxu0 0
      %396 = vmatpush2.bf16.msra.mxu0 0
      %397 = vmatprep.subr.bf16.mxu0 0
      %398 = vmatpush2.bf16.msra.mxu0 0
      %399 = vmatprep.subr.bf16.mxu0 0
      %400 = vmatpush2.bf16.msra.mxu0 0
      %401 = vmatprep.mubr.bf16.mxu0 0
      %402 = vmatmul.mubr.bf16.gmra.mxu0 %v360
      %v403 = vpop.f32.mrf.mxu0
      %v404 = vadd.f32 %v345, %v403
      %v405 = vpop.f32.mrf.mxu0
      %v406 = vpop.f32.mrf.mxu0
      %v407 = vadd.f32 %v345, %v406
      %v408 = vpop.f32.mrf.mxu0
      %409 = vdwg.mxu0
      %v410 = vld [vmem:[%s3 + $0x4] sm:$0xf]
      %v411 = vld [vmem:[%s3 + $0x18] sm:$0xf]
      %v412 = vld [vmem:[%s3 + $0x2c] sm:$0xf]
      %v413 = vld [vmem:[%s3 + $0x40] sm:$0xf]
      %v414 = vld [vmem:[%s4 + $0x1] sm:$0x1]
      %v416 = vlaneseq
      %v417 = vshrl.u32 %v416, 7
      %v418 = vsub.s32 0, %v417
      %v419 = vrot.slane %v414, %v418
      %v425 = vunpack.c.l.b16 %v410
      %v426 = vunpack.c.l.b16 %v411
      %v427 = vunpack.c.l.b16 %v412
      %v428 = vunpack.c.l.b16 %v413
      %v429 = vpack.c.b16 %v426, %v425
      %v430 = vpack.c.b16 %v428, %v427
      %v433 = vand.u32 %v430, %v365
      %435 = vmatprep.subr.bf16.mxu0 0
      %436 = vmatpush1.bf16.msra.mxu0 0
      %437 = vmatprep.subr.bf16.mxu0 0
      %438 = vmatpush1.bf16.msra.mxu0 0
      %439 = vmatprep.subr.bf16.mxu0 0
      %440 = vmatpush1.bf16.msra.mxu0 0
      %441 = vmatprep.subr.bf16.mxu0 0
      %442 = vmatpush1.bf16.msra.mxu0 0
      %443 = vmatprep.subr.bf16.mxu0 0
      %444 = vmatpush1.bf16.msra.mxu0 0
      %445 = vmatprep.subr.bf16.mxu0 0
      %446 = vmatpush1.bf16.msra.mxu0 0
      %447 = vmatprep.subr.bf16.mxu0 0
      %448 = vmatpush1.bf16.msra.mxu0 %v433
      %449 = vmatprep.subr.bf16.mxu0 0
      %450 = vmatpush1.bf16.msra.mxu0 %v429
      %451 = vmatprep.subr.bf16.mxu0 0
      %452 = vmatpush2.bf16.msra.mxu0 0
      %453 = vmatprep.subr.bf16.mxu0 0
      %454 = vmatpush2.bf16.msra.mxu0 0
      %455 = vmatprep.subr.bf16.mxu0 0
      %456 = vmatpush2.bf16.msra.mxu0 0
      %457 = vmatprep.subr.bf16.mxu0 0
      %458 = vmatpush2.bf16.msra.mxu0 0
      %459 = vmatprep.subr.bf16.mxu0 0
      %460 = vmatpush2.bf16.msra.mxu0 0
      %461 = vmatprep.subr.bf16.mxu0 0
      %462 = vmatpush2.bf16.msra.mxu0 0
      %463 = vmatprep.subr.bf16.mxu0 0
      %464 = vmatpush2.bf16.msra.mxu0 0
      %465 = vmatprep.subr.bf16.mxu0 0
      %466 = vmatpush2.bf16.msra.mxu0 0
      %467 = vmatprep.mubr.bf16.mxu0 0
      %468 = vmatmul.mubr.bf16.gmra.mxu0 %v360
      %v469 = vpop.f32.mrf.mxu0
      %v470 = vadd.f32 %v419, %v469
      %v471 = vpop.f32.mrf.mxu0
      %v472 = vpop.f32.mrf.mxu0
      %v473 = vadd.f32 %v419, %v472
      %v474 = vpop.f32.mrf.mxu0
      %475 = vdwg.mxu0
      %v476 = vmul.f32 %v404, %v470
      %v477 = vmul.f32 %v407, %v473
      %v478 = vld [vmem:[%s3 + $0x8] sm:$0xf]
      %v479 = vld [vmem:[%s3 + $0x1c] sm:$0xf]
      %v480 = vld [vmem:[%s3 + $0x30] sm:$0xf]
      %v481 = vld [vmem:[%s3 + $0x44] sm:$0xf]
      %v482 = vld [vmem:[%s4 + $0x2] sm:$0x1]
      %v484 = vlaneseq
      %v485 = vshrl.u32 %v484, 7
      %v486 = vsub.s32 0, %v485
      %v487 = vrot.slane %v482, %v486
      %v493 = vunpack.c.l.b16 %v478
      %v494 = vunpack.c.l.b16 %v479
      %v495 = vunpack.c.l.b16 %v480
      %v496 = vunpack.c.l.b16 %v481
      %v497 = vpack.c.b16 %v494, %v493
      %v498 = vpack.c.b16 %v496, %v495
      %v501 = vand.u32 %v498, %v365
      %503 = vmatprep.subr.bf16.mxu0 0
      %504 = vmatpush1.bf16.msra.mxu0 0
      %505 = vmatprep.subr.bf16.mxu0 0
      %506 = vmatpush1.bf16.msra.mxu0 0
      %507 = vmatprep.subr.bf16.mxu0 0
      %508 = vmatpush1.bf16.msra.mxu0 0
      %509 = vmatprep.subr.bf16.mxu0 0
      %510 = vmatpush1.bf16.msra.mxu0 0
      %511 = vmatprep.subr.bf16.mxu0 0
      %512 = vmatpush1.bf16.msra.mxu0 0
      %513 = vmatprep.subr.bf16.mxu0 0
      %514 = vmatpush1.bf16.msra.mxu0 0
      %515 = vmatprep.subr.bf16.mxu0 0
      %516 = vmatpush1.bf16.msra.mxu0 %v501
      %517 = vmatprep.subr.bf16.mxu0 0
      %518 = vmatpush1.bf16.msra.mxu0 %v497
      %519 = vmatprep.subr.bf16.mxu0 0
      %520 = vmatpush2.bf16.msra.mxu0 0
      %521 = vmatprep.subr.bf16.mxu0 0
      %522 = vmatpush2.bf16.msra.mxu0 0
      %523 = vmatprep.subr.bf16.mxu0 0
      %524 = vmatpush2.bf16.msra.mxu0 0
      %525 = vmatprep.subr.bf16.mxu0 0
      %526 = vmatpush2.bf16.msra.mxu0 0
      %527 = vmatprep.subr.bf16.mxu0 0
      %528 = vmatpush2.bf16.msra.mxu0 0
      %529 = vmatprep.subr.bf16.mxu0 0
      %530 = vmatpush2.bf16.msra.mxu0 0
      %531 = vmatprep.subr.bf16.mxu0 0
      %532 = vmatpush2.bf16.msra.mxu0 0
      %533 = vmatprep.subr.bf16.mxu0 0
      %534 = vmatpush2.bf16.msra.mxu0 0
      %535 = vmatprep.mubr.bf16.mxu0 0
      %536 = vmatmul.mubr.bf16.gmra.mxu0 %v360
      %v537 = vpop.f32.mrf.mxu0
      %v538 = vadd.f32 %v487, %v537
      %v539 = vpop.f32.mrf.mxu0
      %v540 = vpop.f32.mrf.mxu0
      %v541 = vadd.f32 %v487, %v540
      %v542 = vpop.f32.mrf.mxu0
      %543 = vdwg.mxu0
      %v544 = vmul.f32 %v476, %v538
      %v545 = vmul.f32 %v477, %v541
      %v546 = vld [vmem:[%s3 + $0xc] sm:$0xf]
      %v547 = vld [vmem:[%s3 + $0x20] sm:$0xf]
      %v548 = vld [vmem:[%s3 + $0x34] sm:$0xf]
      %v549 = vld [vmem:[%s3 + $0x48] sm:$0xf]
      %v550 = vld [vmem:[%s4 + $0x3] sm:$0x1]
      %v552 = vlaneseq
      %v553 = vshrl.u32 %v552, 7
      %v554 = vsub.s32 0, %v553
      %v555 = vrot.slane %v550, %v554
      %v561 = vunpack.c.l.b16 %v546
      %v562 = vunpack.c.l.b16 %v547
      %v563 = vunpack.c.l.b16 %v548
      %v564 = vunpack.c.l.b16 %v549
      %v565 = vpack.c.b16 %v562, %v561
      %v566 = vpack.c.b16 %v564, %v563
      %v569 = vand.u32 %v566, %v365
      %571 = vmatprep.subr.bf16.mxu0 0
      %572 = vmatpush1.bf16.msra.mxu0 0
      %573 = vmatprep.subr.bf16.mxu0 0
      %574 = vmatpush1.bf16.msra.mxu0 0
      %575 = vmatprep.subr.bf16.mxu0 0
      %576 = vmatpush1.bf16.msra.mxu0 0
      %577 = vmatprep.subr.bf16.mxu0 0
      %578 = vmatpush1.bf16.msra.mxu0 0
      %579 = vmatprep.subr.bf16.mxu0 0
      %580 = vmatpush1.bf16.msra.mxu0 0
      %581 = vmatprep.subr.bf16.mxu0 0
      %582 = vmatpush1.bf16.msra.mxu0 0
      %583 = vmatprep.subr.bf16.mxu0 0
      %584 = vmatpush1.bf16.msra.mxu0 %v569
      %585 = vmatprep.subr.bf16.mxu0 0
      %586 = vmatpush1.bf16.msra.mxu0 %v565
      %587 = vmatprep.subr.bf16.mxu0 0
      %588 = vmatpush2.bf16.msra.mxu0 0
      %589 = vmatprep.subr.bf16.mxu0 0
      %590 = vmatpush2.bf16.msra.mxu0 0
      %591 = vmatprep.subr.bf16.mxu0 0
      %592 = vmatpush2.bf16.msra.mxu0 0
      %593 = vmatprep.subr.bf16.mxu0 0
      %594 = vmatpush2.bf16.msra.mxu0 0
      %595 = vmatprep.subr.bf16.mxu0 0
      %596 = vmatpush2.bf16.msra.mxu0 0
      %597 = vmatprep.subr.bf16.mxu0 0
      %598 = vmatpush2.bf16.msra.mxu0 0
      %599 = vmatprep.subr.bf16.mxu0 0
      %600 = vmatpush2.bf16.msra.mxu0 0
      %601 = vmatprep.subr.bf16.mxu0 0
      %602 = vmatpush2.bf16.msra.mxu0 0
      %603 = vmatprep.mubr.bf16.mxu0 0
      %604 = vmatmul.mubr.bf16.gmra.mxu0 %v360
      %v605 = vpop.f32.mrf.mxu0
      %v606 = vadd.f32 %v555, %v605
      %v607 = vpop.f32.mrf.mxu0
      %v608 = vpop.f32.mrf.mxu0
      %v609 = vadd.f32 %v555, %v608
      %v610 = vpop.f32.mrf.mxu0
      %611 = vdwg.mxu0
      %v612 = vmul.f32 %v544, %v606
      %v613 = vmul.f32 %v545, %v609
      %v614 = vld [vmem:[%s3 + $0x10] sm:$0xf]
      %v615 = vld [vmem:[%s3 + $0x24] sm:$0xf]
      %v616 = vld [vmem:[%s3 + $0x38] sm:$0xf]
      %v617 = vld [vmem:[%s3 + $0x4c] sm:$0xf]
      %v618 = vld [vmem:[%s4 + $0x4] sm:$0x1]
      %v620 = vlaneseq
      %v621 = vshrl.u32 %v620, 7
      %v622 = vsub.s32 0, %v621
      %v623 = vrot.slane %v618, %v622
      %v629 = vunpack.c.l.b16 %v614
      %v630 = vunpack.c.l.b16 %v615
      %v631 = vunpack.c.l.b16 %v616
      %v632 = vunpack.c.l.b16 %v617
      %v633 = vpack.c.b16 %v630, %v629
      %v634 = vpack.c.b16 %v632, %v631
      %v637 = vand.u32 %v634, %v365
      %639 = vmatprep.subr.bf16.mxu0 0
      %640 = vmatpush1.bf16.msra.mxu0 0
      %641 = vmatprep.subr.bf16.mxu0 0
      %642 = vmatpush1.bf16.msra.mxu0 0
      %643 = vmatprep.subr.bf16.mxu0 0
      %644 = vmatpush1.bf16.msra.mxu0 0
      %645 = vmatprep.subr.bf16.mxu0 0
      %646 = vmatpush1.bf16.msra.mxu0 0
      %647 = vmatprep.subr.bf16.mxu0 0
      %648 = vmatpush1.bf16.msra.mxu0 0
      %649 = vmatprep.subr.bf16.mxu0 0
      %650 = vmatpush1.bf16.msra.mxu0 0
      %651 = vmatprep.subr.bf16.mxu0 0
      %652 = vmatpush1.bf16.msra.mxu0 %v637
      %653 = vmatprep.subr.bf16.mxu0 0
      %654 = vmatpush1.bf16.msra.mxu0 %v633
      %655 = vmatprep.subr.bf16.mxu0 0
      %656 = vmatpush2.bf16.msra.mxu0 0
      %657 = vmatprep.subr.bf16.mxu0 0
      %658 = vmatpush2.bf16.msra.mxu0 0
      %659 = vmatprep.subr.bf16.mxu0 0
      %660 = vmatpush2.bf16.msra.mxu0 0
      %661 = vmatprep.subr.bf16.mxu0 0
      %662 = vmatpush2.bf16.msra.mxu0 0
      %663 = vmatprep.subr.bf16.mxu0 0
      %664 = vmatpush2.bf16.msra.mxu0 0
      %665 = vmatprep.subr.bf16.mxu0 0
      %666 = vmatpush2.bf16.msra.mxu0 0
      %667 = vmatprep.subr.bf16.mxu0 0
      %668 = vmatpush2.bf16.msra.mxu0 0
      %669 = vmatprep.subr.bf16.mxu0 0
      %670 = vmatpush2.bf16.msra.mxu0 0
      %671 = vmatprep.mubr.bf16.mxu0 0
      %672 = vmatmul.mubr.bf16.gmra.mxu0 %v360
      %v673 = vpop.f32.mrf.mxu0
      %v674 = vadd.f32 %v623, %v673
      %v675 = vpop.f32.mrf.mxu0
      %v676 = vpop.f32.mrf.mxu0
      %v677 = vadd.f32 %v623, %v676
      %v678 = vpop.f32.mrf.mxu0
      %679 = vdwg.mxu0
      %v680 = vmul.f32 %v612, %v674
      %v681 = vmul.f32 %v613, %v677
      %v682 = vpack.c.bf16 %v681, %v680
      %v683 = vld [vmem:[%s5] sm:$0xf]
      %v684 = vld [vmem:[%s5 + $0x4] sm:$0xf]
      %v685 = vld [vmem:[%s5 + $0x8] sm:$0xf]
      %v686 = vld [vmem:[%s5 + $0xc] sm:$0xf]
      %v687 = vld [vmem:[%s5 + $0x10] sm:$0xf]
      %v688 = vld [vmem:[%s5 + $0x14] sm:$0xf]
      %v689 = vld [vmem:[%s5 + $0x18] sm:$0xf]
      %v690 = vld [vmem:[%s5 + $0x1c] sm:$0xf]
      %v691 = vld [vmem:[%s5 + $0x20] sm:$0xf]
      %v692 = vld [vmem:[%s5 + $0x24] sm:$0xf]
      %v693 = vld [vmem:[%s5 + $0x28] sm:$0xf]
      %v694 = vld [vmem:[%s5 + $0x2c] sm:$0xf]
      %v695 = vld [vmem:[%s5 + $0x30] sm:$0xf]
      %v696 = vld [vmem:[%s5 + $0x34] sm:$0xf]
      %v697 = vld [vmem:[%s5 + $0x38] sm:$0xf]
      %v698 = vld [vmem:[%s5 + $0x3c] sm:$0xf]
      %v715 = vunpack.c.l.b16 %v683
      %v716 = vunpack.c.l.b16 %v684
      %v717 = vunpack.c.l.b16 %v685
      %v718 = vunpack.c.l.b16 %v686
      %v719 = vunpack.c.l.b16 %v687
      %v720 = vunpack.c.l.b16 %v688
      %v721 = vunpack.c.l.b16 %v689
      %v722 = vunpack.c.l.b16 %v690
      %v723 = vunpack.c.l.b16 %v691
      %v724 = vunpack.c.l.b16 %v692
      %v725 = vunpack.c.l.b16 %v693
      %v726 = vunpack.c.l.b16 %v694
      %v727 = vunpack.c.l.b16 %v695
      %v728 = vunpack.c.l.b16 %v696
      %v729 = vunpack.c.l.b16 %v697
      %v730 = vunpack.c.l.b16 %v698
      %v731 = vpack.c.b16 %v716, %v715
      %v732 = vpack.c.b16 %v718, %v717
      %v733 = vpack.c.b16 %v720, %v719
      %v734 = vpack.c.b16 %v722, %v721
      %v735 = vpack.c.b16 %v724, %v723
      %v736 = vpack.c.b16 %v726, %v725
      %v737 = vpack.c.b16 %v728, %v727
      %v738 = vpack.c.b16 %v730, %v729
      %747 = vmatprep.subr.bf16.mxu0 0
      %748 = vmatpush1.bf16.msra.mxu0 %v738
      %749 = vmatprep.subr.bf16.mxu0 0
      %750 = vmatpush1.bf16.msra.mxu0 %v737
      %751 = vmatprep.subr.bf16.mxu0 0
      %752 = vmatpush1.bf16.msra.mxu0 %v736
      %753 = vmatprep.subr.bf16.mxu0 0
      %754 = vmatpush1.bf16.msra.mxu0 %v735
      %755 = vmatprep.subr.bf16.mxu0 0
      %756 = vmatpush1.bf16.msra.mxu0 %v734
      %757 = vmatprep.subr.bf16.mxu0 0
      %758 = vmatpush1.bf16.msra.mxu0 %v733
      %759 = vmatprep.subr.bf16.mxu0 0
      %760 = vmatpush1.bf16.msra.mxu0 %v732
      %761 = vmatprep.subr.bf16.mxu0 0
      %762 = vmatpush1.bf16.msra.mxu0 %v731
      %763 = vmatprep.subr.bf16.mxu0 0
      %764 = vmatpush2.bf16.msra.mxu0 0
      %765 = vmatprep.subr.bf16.mxu0 0
      %766 = vmatpush2.bf16.msra.mxu0 0
      %767 = vmatprep.subr.bf16.mxu0 0
      %768 = vmatpush2.bf16.msra.mxu0 0
      %769 = vmatprep.subr.bf16.mxu0 0
      %770 = vmatpush2.bf16.msra.mxu0 0
      %771 = vmatprep.subr.bf16.mxu0 0
      %772 = vmatpush2.bf16.msra.mxu0 0
      %773 = vmatprep.subr.bf16.mxu0 0
      %774 = vmatpush2.bf16.msra.mxu0 0
      %775 = vmatprep.subr.bf16.mxu0 0
      %776 = vmatpush2.bf16.msra.mxu0 0
      %777 = vmatprep.subr.bf16.mxu0 0
      %778 = vmatpush2.bf16.msra.mxu0 0
      %779 = vmatprep.mubr.bf16.mxu0 0
      %780 = vmatmul.mubr.bf16.gmra.mxu0 %v682
      %v781 = vpop.f32.mrf.mxu0
      %v782 = vadd.f32 0.0, %v781
      %v783 = vpop.f32.mrf.mxu0
      %v784 = vpop.f32.mrf.mxu0
      %v785 = vadd.f32 0.0, %v784
      %v786 = vpop.f32.mrf.mxu0
      %787 = vdwg.mxu0
      %vm788 = vcmask 31744
      %789 = vst.msk [vmem:[%s253] sm:$0xff] %vm788, %v782
      %790 = vst.msk [vmem:[%s253 + $0x8] sm:$0xff] %vm788, %v785
      %s791 = smul.u32 2, %s17
      %p792 = scmp.lt.s32.totalorder %s791, 3
      %s793 = scalar_select %p792, %s791, 3
      %s794 = smul.addr %s793, 8
      %s795 = scalar_lea.vmem %s6, %s794
      // Predicated region
      $region45: #{sdt_forward.1} parent=43 // pred_check
        %p796 = pneg %p166
      $region46: #{sdt_forward.1} parent=43 // pred_check_branch
        %798 = sbr.rel (%p796) target = $region48
      $region47: #{sdt_forward.1} parent=43 // pred_region
        %s799 = smul.u32 2, %s17
      $region48: #{sdt_forward.1} parent=43 // pred_fallthru
        _
    $region44: #{sdt_forward.1} parent=5 // pred_fallthru
      _
    %p800 = scmp.le.s32.totalorder 2, %s12
    // Predicated region
    $region49: #{sdt_forward.1} parent=5 // pred_check
      %p801 = pneg %p800
    $region50: #{sdt_forward.1} parent=5 // pred_check_branch
      %803 = sbr.rel (%p801) target = $region52
    $region51: #{sdt_forward.1} parent=5 // pred_region
      %s804 = ssub.s32 %s12, 2
      // Predicated region
      $region53: #{sdt_forward.1} parent=51 // pred_check
        %p805 = pneg %p172
      $region54: #{sdt_forward.1} parent=51 // pred_check_branch
        %807 = sbr.rel (%p805) target = $region56
      $region55: #{sdt_forward.1} parent=51 // pred_region
        %s808 = smul.u32 2, %s18
        %p809 = scmp.lt.s32.totalorder %s808, 3
        %s810 = scalar_select %p809, %s808, 3
        %s811 = smul.addr %s810, 8
        %s812 = scalar_lea.vmem %s6, %s811
      $region56: #{sdt_forward.1} parent=51 // pred_fallthru
        _
    $region52: #{sdt_forward.1} parent=5 // pred_fallthru
      _
  $region6: #{sdt_forward.1} parent=0 // loop_footer
    %s16 = sadd.s32 1, %s12
  $region7: #{sdt_forward.1} parent=0 // loop_footer_branch
    %11 = sbr.rel target = $region3
  $region8: #{sdt_forward.1} parent=0 // loop_exit
    _

</llo_original>
